<compile_context>
chip_gen: v7x
topology: tpu7x:2x2x1
jax: 0.10.0
libtpu: 0.0.40
codegen_flags: <defaults>
</compile_context>

<pallas_src>
import jax
import jax.numpy as jnp
from jax import lax
from jax.experimental import pallas as pl
from jax.experimental.pallas import tpu as pltpu

INPUT_SIZE = 70
HIDDEN1 = 32
HIDDEN2 = 32
HIDDEN3 = 16
HIDDEN4 = 16
LATENT = 16
BN_EPS = 1e-5

LAYER_DIMS = (
    (INPUT_SIZE, HIDDEN1),
    (HIDDEN1, HIDDEN2),
    (HIDDEN2, HIDDEN3),
    (HIDDEN3, HIDDEN4),
    (HIDDEN4, LATENT),
)
N_LAYERS = len(LAYER_DIMS)

IN_PAD = 72   # layer-1 contraction dim padded 70 -> 72 (sublane multiple of 8)
F_PAD = 32    # uniform padded feature width for every hidden / output layer

# Sublane-aligned row offsets of each layer's (fin_pad, F_PAD) block in the slab.
_FIN_PAD = (IN_PAD, F_PAD, F_PAD, F_PAD, F_PAD)
_W_OFFSETS = []
_off = 0
for _p in _FIN_PAD:
    _W_OFFSETS.append(_off)
    _off += _p
W_SLAB_ROWS = _off  # 72 + 4*32 = 200


def _encoder_kernel(xt_ref, w_ref, b_ref, out_ref):
    cdt = xt_ref.dtype  # MXU operand dtype (f32 or bf16); BN math stays f32

    def matmul(w, h):
        # (fin_pad, F_PAD) x (fin_pad, B) -> (F_PAD, B); contraction on dim 0 of both.
        return lax.dot_general(
            w.astype(cdt), h.astype(cdt),
            dimension_numbers=(((0,), (0,)), ((), ())),
            preferred_element_type=jnp.float32)

    def w_block(idx):
        r0 = _W_OFFSETS[idx]
        return w_ref[r0:r0 + _FIN_PAD[idx], :]   # static, sublane-aligned, full width

    def bn_relu(h):
        # BatchNorm1d in training mode: per-batch mean + biased variance,
        # gamma=1, beta=0.  Batch is on the lane axis -> XLU lane reduces.
        mean = jnp.mean(h, axis=-1, keepdims=True)
        c = h - mean
        var = jnp.mean(c * c, axis=-1, keepdims=True)
        inv_std = lax.rsqrt(var + BN_EPS)         # EUP slot
        # ReLU commutes with the positive inv_std scale, so return the unscaled
        # ReLU(c) and fold inv_std into the next layer's small weight block.
        return jnp.maximum(c, 0.0), inv_std

    # Layers 1-4: the pre-BN bias is cancelled exactly by the batch-mean subtraction
    # (beta=0), so no bias add at all.  inv_std from layer i scales layer i+1's
    # (fin, 32) weight block (32x32-sized multiply instead of an (F, B) pass).
    r, s = bn_relu(matmul(w_block(0), xt_ref[...]))
    r, s = bn_relu(matmul(w_block(1) * s, r))
    r, s = bn_relu(matmul(w_block(2) * s, r))
    r, s = bn_relu(matmul(w_block(3) * s, r))
    out_ref[...] = (matmul(w_block(4) * s, r) + b_ref[...]).astype(out_ref.dtype)


def pack_params(params, dtype=jnp.float32):
    """Pack the 5 (w, b) pairs into one weight slab + the final-layer bias column.

    Weights are stored in natural (in_features, out_features) orientation, each layer
    zero-padded to (fin_pad, 32) and stacked at sublane-aligned offsets.  Biases of
    layers 1-4 are dropped (exactly cancelled by training-mode BN with beta=0).
    """
    ws = params[0::2]
    bs = params[1::2]
    slab = jnp.zeros((W_SLAB_ROWS, F_PAD), jnp.float32)
    for i, ((fin, fout), w) in enumerate(zip(LAYER_DIMS, ws)):
        r0 = _W_OFFSETS[i]
        slab = slab.at[r0:r0 + fin, 0:fout].set(w.astype(jnp.float32))
    b_col = jnp.zeros((F_PAD, 1), jnp.float32)
    b_col = b_col.at[0:LATENT, 0].set(jnp.reshape(bs[-1], (-1,)).astype(jnp.float32))
    return slab.astype(dtype), b_col


def _vmem_limit_bytes():
    try:
        cap = int(pltpu.get_tpu_info().vmem_capacity_bytes)
    except Exception:
        cap = 64 << 20  # conservative fallback: v7x per-TensorCore VMEM
    # ~3/4 of physical VMEM, capped -> ~48 MiB on v7x, ~96 MiB on v5e/v6e.
    return min(cap * 3 // 4, 112 << 20)


def encoder_forward(x, w_slab, b_col):
    """x: (B, INPUT_SIZE) f32; w_slab/b_col from pack_params. Returns (B, LATENT) f32."""
    B = x.shape[0]
    cdt = w_slab.dtype
    # Feature-major layout: zero-pad 70 -> 72 input features and transpose so the
    # batch rides the 128-lane axis (lane-dense DMA / VPU / stores).  Done in the
    # XLA wrapper: layout plumbing, not kernel compute.
    xt = jnp.pad(x, ((0, 0), (0, IN_PAD - INPUT_SIZE))).T.astype(cdt)   # (72, B)

    vmem_limit = _vmem_limit_bytes()
    approx_row_bytes = IN_PAD * xt.dtype.itemsize + 5 * F_PAD * 4
    if B * approx_row_bytes > int(vmem_limit * 0.8):
        raise ValueError(
            f"batch {B} too large to stay VMEM-resident for exact single-pass "
            "BatchNorm; split the batch across calls (a tiled version needs a "
            "two-pass / cross-tile sum+sumsq BN to stay exact).")

    matmul_flops = 2 * B * sum(fi * fo for fi, fo in LAYER_DIMS)
    bn_flops = 8 * B * (HIDDEN1 + HIDDEN2 + HIDDEN3 + HIDDEN4)
    bytes_accessed = (xt.size * xt.dtype.itemsize
                      + w_slab.size * w_slab.dtype.itemsize
                      + b_col.size * 4
                      + B * F_PAD * 4)

    outt = pl.pallas_call(
        _encoder_kernel,
        out_shape=jax.ShapeDtypeStruct((F_PAD, B), jnp.float32),
        in_specs=[
            pl.BlockSpec(xt.shape, lambda *_: (0, 0)),
            pl.BlockSpec(w_slab.shape, lambda *_: (0, 0)),
            pl.BlockSpec(b_col.shape, lambda *_: (0, 0)),
        ],
        out_specs=pl.BlockSpec((F_PAD, B), lambda *_: (0, 0)),
        compiler_params=pltpu.CompilerParams(vmem_limit_bytes=int(vmem_limit)),
        cost_estimate=pl.CostEstimate(
            flops=matmul_flops + bn_flops,
            transcendentals=4 * F_PAD,           # one rsqrt per feature per BN layer
            bytes_accessed=int(bytes_accessed),
        ),
    )(xt, w_slab, b_col)

    # Drop padded rows and return batch-major (B, LATENT).
    return outt[:LATENT, :].T


def init_params(key):
    """Deterministic synthetic init (kaiming/xavier-uniform-like ranges).

    Weights stored as (in_features, out_features); biases as (1, out_features).
    Hidden-layer biases are intentionally nonzero to exercise the BN cancellation.
    """
    params = []
    for i, (fin, fout) in enumerate(LAYER_DIMS):
        key, kw, kb = jax.random.split(key, 3)
        bound = (6.0 / (fin + fout)) ** 0.5 if i == N_LAYERS - 1 else (6.0 / fin) ** 0.5
        w = jax.random.uniform(kw, (fin, fout), jnp.float32, -bound, bound)
        b = jax.random.uniform(kb, (1, fout), jnp.float32, -0.1, 0.1)
        params += [w, b]
    return tuple(params)


def encoder_reference(x, params):
    """Pure-JAX reference of the same forward pass (sanity check, keeps all biases)."""
    w1, b1, w2, b2, w3, b3, w4, b4, wm, bm = params

    def bn_relu(h):
        mean = jnp.mean(h, axis=0, keepdims=True)
        var = jnp.mean((h - mean) ** 2, axis=0, keepdims=True)
        return jnp.maximum((h - mean) / jnp.sqrt(var + BN_EPS), 0.0)

    h = bn_relu(x @ w1 + b1)
    h = bn_relu(h @ w2 + b2)
    h = bn_relu(h @ w3 + b3)
    h = bn_relu(h @ w4 + b4)
    return h @ wm + bm


if __name__ == "__main__":
    key = jax.random.PRNGKey(0)
    key, kx = jax.random.split(key)
    B = 8
    x = jax.random.normal(kx, (B, INPUT_SIZE), jnp.float32)
    params = init_params(key)
    ref = encoder_reference(x, params)

    # f32 MXU operands: tight check against the f32 reference.
    w_slab32, b_col = pack_params(params, jnp.float32)
    latent = jax.block_until_ready(encoder_forward(x, w_slab32, b_col))
    assert latent.shape == (B, LATENT)
    assert jnp.allclose(latent, ref, atol=1e-4, rtol=1e-4), "f32 mismatch vs JAX reference"

    # bf16 MXU operands (BN stays f32 in-kernel): looser tolerance.
    w_slab_bf, b_col_bf = pack_params(params, jnp.bfloat16)
    latent_bf = jax.block_until_ready(encoder_forward(x, w_slab_bf, b_col_bf))
    assert jnp.allclose(latent_bf, ref, atol=1.5e-1, rtol=1e-1), "bf16 mismatch vs JAX reference"

    print("KERNEL_OK")
</pallas_src>

<mosaic_0001>
module attributes {stable_mosaic.version = 11 : i64} {
  func.func @_encoder_kernel(%arg0: memref<72x8xf32, #tpu.memory_space<vmem>>, %arg1: memref<200x32xf32, #tpu.memory_space<vmem>>, %arg2: memref<32x1xf32, #tpu.memory_space<vmem>>, %arg3: memref<32x8xf32, #tpu.memory_space<vmem>>) attributes {dimension_semantics = [], scalar_prefetch = 0 : i64, scratch_operands = 0 : i64, tpu.core_type = #tpu.core_type<tc>} {
    %c0 = arith.constant 0 : index
    %c0_0 = arith.constant 0 : index
    %0 = vector.load %arg1[%c0, %c0_0] : memref<200x32xf32, #tpu.memory_space<vmem>>, vector<72x32xf32>
    %c0_1 = arith.constant 0 : index
    %c0_2 = arith.constant 0 : index
    %1 = vector.load %arg0[%c0_1, %c0_2] : memref<72x8xf32, #tpu.memory_space<vmem>>, vector<72x8xf32>
    %cst = arith.constant dense<0.000000e+00> : vector<32x8xf32>
    %2 = tpu.matmul %0, %1, %cst {dimension_numbers = #tpu.dot_dimension_numbers<[0], [0], [1], [1], [0, 1, 1, 1], [], []>} : vector<72x32xf32>, vector<72x8xf32>, vector<32x8xf32> -> vector<32x8xf32>
    %cst_3 = arith.constant dense<0.000000e+00> : vector<32xf32>
    %3 = vector.multi_reduction <add>, %2, %cst_3 [1] : vector<32x8xf32> to vector<32xf32>
    %4 = vector.shape_cast %3 : vector<32xf32> to vector<32x1xf32>
    %cst_4 = arith.constant 8.000000e+00 : f32
    %5 = vector.broadcast %cst_4 : f32 to vector<32x1xf32>
    %6 = arith.divf %4, %5 : vector<32x1xf32>
    %7 = vector.broadcast %6 : vector<32x1xf32> to vector<32x8xf32>
    %8 = arith.subf %2, %7 : vector<32x8xf32>
    %9 = arith.mulf %8, %8 : vector<32x8xf32>
    %cst_5 = arith.constant dense<0.000000e+00> : vector<32xf32>
    %10 = vector.multi_reduction <add>, %9, %cst_5 [1] : vector<32x8xf32> to vector<32xf32>
    %11 = vector.shape_cast %10 : vector<32xf32> to vector<32x1xf32>
    %cst_6 = arith.constant 8.000000e+00 : f32
    %12 = vector.broadcast %cst_6 : f32 to vector<32x1xf32>
    %13 = arith.divf %11, %12 : vector<32x1xf32>
    %cst_7 = arith.constant 9.99999974E-6 : f32
    %14 = vector.broadcast %cst_7 : f32 to vector<32x1xf32>
    %15 = arith.addf %13, %14 : vector<32x1xf32>
    %16 = math.rsqrt %15 : vector<32x1xf32>
    %cst_8 = arith.constant 0.000000e+00 : f32
    %17 = vector.broadcast %cst_8 : f32 to vector<32x8xf32>
    %18 = arith.maximumf %8, %17 : vector<32x8xf32>
    %c72 = arith.constant 72 : index
    %c0_9 = arith.constant 0 : index
    %19 = vector.load %arg1[%c72, %c0_9] : memref<200x32xf32, #tpu.memory_space<vmem>>, vector<32x32xf32>
    %20 = vector.broadcast %16 : vector<32x1xf32> to vector<32x32xf32>
    %21 = arith.mulf %19, %20 : vector<32x32xf32>
    %cst_10 = arith.constant dense<0.000000e+00> : vector<32x8xf32>
    %22 = tpu.matmul %21, %18, %cst_10 {dimension_numbers = #tpu.dot_dimension_numbers<[0], [0], [1], [1], [0, 1, 1, 1], [], []>} : vector<32x32xf32>, vector<32x8xf32>, vector<32x8xf32> -> vector<32x8xf32>
    %cst_11 = arith.constant dense<0.000000e+00> : vector<32xf32>
    %23 = vector.multi_reduction <add>, %22, %cst_11 [1] : vector<32x8xf32> to vector<32xf32>
    %24 = vector.shape_cast %23 : vector<32xf32> to vector<32x1xf32>
    %cst_12 = arith.constant 8.000000e+00 : f32
    %25 = vector.broadcast %cst_12 : f32 to vector<32x1xf32>
    %26 = arith.divf %24, %25 : vector<32x1xf32>
    %27 = vector.broadcast %26 : vector<32x1xf32> to vector<32x8xf32>
    %28 = arith.subf %22, %27 : vector<32x8xf32>
    %29 = arith.mulf %28, %28 : vector<32x8xf32>
    %cst_13 = arith.constant dense<0.000000e+00> : vector<32xf32>
    %30 = vector.multi_reduction <add>, %29, %cst_13 [1] : vector<32x8xf32> to vector<32xf32>
    %31 = vector.shape_cast %30 : vector<32xf32> to vector<32x1xf32>
    %cst_14 = arith.constant 8.000000e+00 : f32
    %32 = vector.broadcast %cst_14 : f32 to vector<32x1xf32>
    %33 = arith.divf %31, %32 : vector<32x1xf32>
    %cst_15 = arith.constant 9.99999974E-6 : f32
    %34 = vector.broadcast %cst_15 : f32 to vector<32x1xf32>
    %35 = arith.addf %33, %34 : vector<32x1xf32>
    %36 = math.rsqrt %35 : vector<32x1xf32>
    %cst_16 = arith.constant 0.000000e+00 : f32
    %37 = vector.broadcast %cst_16 : f32 to vector<32x8xf32>
    %38 = arith.maximumf %28, %37 : vector<32x8xf32>
    %c104 = arith.constant 104 : index
    %c0_17 = arith.constant 0 : index
    %39 = vector.load %arg1[%c104, %c0_17] : memref<200x32xf32, #tpu.memory_space<vmem>>, vector<32x32xf32>
    %40 = vector.broadcast %36 : vector<32x1xf32> to vector<32x32xf32>
    %41 = arith.mulf %39, %40 : vector<32x32xf32>
    %cst_18 = arith.constant dense<0.000000e+00> : vector<32x8xf32>
    %42 = tpu.matmul %41, %38, %cst_18 {dimension_numbers = #tpu.dot_dimension_numbers<[0], [0], [1], [1], [0, 1, 1, 1], [], []>} : vector<32x32xf32>, vector<32x8xf32>, vector<32x8xf32> -> vector<32x8xf32>
    %cst_19 = arith.constant dense<0.000000e+00> : vector<32xf32>
    %43 = vector.multi_reduction <add>, %42, %cst_19 [1] : vector<32x8xf32> to vector<32xf32>
    %44 = vector.shape_cast %43 : vector<32xf32> to vector<32x1xf32>
    %cst_20 = arith.constant 8.000000e+00 : f32
    %45 = vector.broadcast %cst_20 : f32 to vector<32x1xf32>
    %46 = arith.divf %44, %45 : vector<32x1xf32>
    %47 = vector.broadcast %46 : vector<32x1xf32> to vector<32x8xf32>
    %48 = arith.subf %42, %47 : vector<32x8xf32>
    %49 = arith.mulf %48, %48 : vector<32x8xf32>
    %cst_21 = arith.constant dense<0.000000e+00> : vector<32xf32>
    %50 = vector.multi_reduction <add>, %49, %cst_21 [1] : vector<32x8xf32> to vector<32xf32>
    %51 = vector.shape_cast %50 : vector<32xf32> to vector<32x1xf32>
    %cst_22 = arith.constant 8.000000e+00 : f32
    %52 = vector.broadcast %cst_22 : f32 to vector<32x1xf32>
    %53 = arith.divf %51, %52 : vector<32x1xf32>
    %cst_23 = arith.constant 9.99999974E-6 : f32
    %54 = vector.broadcast %cst_23 : f32 to vector<32x1xf32>
    %55 = arith.addf %53, %54 : vector<32x1xf32>
    %56 = math.rsqrt %55 : vector<32x1xf32>
    %cst_24 = arith.constant 0.000000e+00 : f32
    %57 = vector.broadcast %cst_24 : f32 to vector<32x8xf32>
    %58 = arith.maximumf %48, %57 : vector<32x8xf32>
    %c136 = arith.constant 136 : index
    %c0_25 = arith.constant 0 : index
    %59 = vector.load %arg1[%c136, %c0_25] : memref<200x32xf32, #tpu.memory_space<vmem>>, vector<32x32xf32>
    %60 = vector.broadcast %56 : vector<32x1xf32> to vector<32x32xf32>
    %61 = arith.mulf %59, %60 : vector<32x32xf32>
    %cst_26 = arith.constant dense<0.000000e+00> : vector<32x8xf32>
    %62 = tpu.matmul %61, %58, %cst_26 {dimension_numbers = #tpu.dot_dimension_numbers<[0], [0], [1], [1], [0, 1, 1, 1], [], []>} : vector<32x32xf32>, vector<32x8xf32>, vector<32x8xf32> -> vector<32x8xf32>
    %cst_27 = arith.constant dense<0.000000e+00> : vector<32xf32>
    %63 = vector.multi_reduction <add>, %62, %cst_27 [1] : vector<32x8xf32> to vector<32xf32>
    %64 = vector.shape_cast %63 : vector<32xf32> to vector<32x1xf32>
    %cst_28 = arith.constant 8.000000e+00 : f32
    %65 = vector.broadcast %cst_28 : f32 to vector<32x1xf32>
    %66 = arith.divf %64, %65 : vector<32x1xf32>
    %67 = vector.broadcast %66 : vector<32x1xf32> to vector<32x8xf32>
    %68 = arith.subf %62, %67 : vector<32x8xf32>
    %69 = arith.mulf %68, %68 : vector<32x8xf32>
    %cst_29 = arith.constant dense<0.000000e+00> : vector<32xf32>
    %70 = vector.multi_reduction <add>, %69, %cst_29 [1] : vector<32x8xf32> to vector<32xf32>
    %71 = vector.shape_cast %70 : vector<32xf32> to vector<32x1xf32>
    %cst_30 = arith.constant 8.000000e+00 : f32
    %72 = vector.broadcast %cst_30 : f32 to vector<32x1xf32>
    %73 = arith.divf %71, %72 : vector<32x1xf32>
    %cst_31 = arith.constant 9.99999974E-6 : f32
    %74 = vector.broadcast %cst_31 : f32 to vector<32x1xf32>
    %75 = arith.addf %73, %74 : vector<32x1xf32>
    %76 = math.rsqrt %75 : vector<32x1xf32>
    %cst_32 = arith.constant 0.000000e+00 : f32
    %77 = vector.broadcast %cst_32 : f32 to vector<32x8xf32>
    %78 = arith.maximumf %68, %77 : vector<32x8xf32>
    %c168 = arith.constant 168 : index
    %c0_33 = arith.constant 0 : index
    %79 = vector.load %arg1[%c168, %c0_33] : memref<200x32xf32, #tpu.memory_space<vmem>>, vector<32x32xf32>
    %80 = vector.broadcast %76 : vector<32x1xf32> to vector<32x32xf32>
    %81 = arith.mulf %79, %80 : vector<32x32xf32>
    %cst_34 = arith.constant dense<0.000000e+00> : vector<32x8xf32>
    %82 = tpu.matmul %81, %78, %cst_34 {dimension_numbers = #tpu.dot_dimension_numbers<[0], [0], [1], [1], [0, 1, 1, 1], [], []>} : vector<32x32xf32>, vector<32x8xf32>, vector<32x8xf32> -> vector<32x8xf32>
    %c0_35 = arith.constant 0 : index
    %c0_36 = arith.constant 0 : index
    %83 = vector.load %arg2[%c0_35, %c0_36] : memref<32x1xf32, #tpu.memory_space<vmem>>, vector<32x1xf32>
    %84 = vector.broadcast %83 : vector<32x1xf32> to vector<32x8xf32>
    %85 = arith.addf %82, %84 : vector<32x8xf32>
    %c0_37 = arith.constant 0 : index
    %c0_38 = arith.constant 0 : index
    %86 = vector.load %arg3[%c0_37, %c0_38] : memref<32x8xf32, #tpu.memory_space<vmem>>, vector<32x8xf32>
    tpu.vector_store %arg3[%c0_37, %c0_38], %85 {strides = array<i32>} : memref<32x8xf32, #tpu.memory_space<vmem>>, vector<32x8xf32>,
    return
  }
}

</mosaic_0001>

<llo_original>
// kernel: tpu_custom_call.1
$region0: #{tpu_custom_call.1}
  #allocation0 [shape = 'u32[]', space=smem, size = 0x4, offset = 0x4, fixed_abs, tag = 'smem constant byte address 0x4 - core index']
  #allocation1 [shape = 'u32[144,128]{1,0:T(1,128)}', space=vmem, size = 0x12000, scoped, tag = 'internal scratch']
  %s0 = inlined_call_operand.vmem [shape: f32[72,8], index: 0, kind: input, shape index: {}]
  %s1 = inlined_call_operand.vmem [shape: f32[200,32], index: 1, kind: input, shape index: {}]
  %s2 = inlined_call_operand.vmem [shape: f32[32,1], index: 2, kind: input, shape index: {}]
  %s3 = inlined_call_operand.vmem [shape: f32[32,8], index: 3, kind: output, shape index: {}]
  %s4 = sld [smem:[#allocation0]]
  $region22: #{tpu_custom_call.1} parent=0
    _
  %s6 = ssub.s32 1, %s4
  %s7 = scalar_select 0, %s6, %s4
  // Predicated region
  $region2: #{tpu_custom_call.1} parent=0 // pred_check
    _
  $region3: #{tpu_custom_call.1} parent=0 // pred_check_branch
    %9 = sbr.rel (0) target = $region5
  $region4: #{tpu_custom_call.1} parent=0 // pred_region
    _
  $region5: #{tpu_custom_call.1} parent=0 // pred_fallthru
    _
  // Predicated region
  $region6: #{tpu_custom_call.1} parent=0 // pred_check
    _
  $region7: #{tpu_custom_call.1} parent=0 // pred_check_branch
    %11 = sbr.rel (0) target = $region9
  $region8: #{tpu_custom_call.1} parent=0 // pred_region
    _
  $region9: #{tpu_custom_call.1} parent=0 // pred_fallthru
    _
  // Predicated region
  $region10: #{tpu_custom_call.1} parent=0 // pred_check
    _
  $region11: #{tpu_custom_call.1} parent=0 // pred_check_branch
    %13 = sbr.rel (0) target = $region13
  $region12: #{tpu_custom_call.1} parent=0 // pred_region
    _
  $region13: #{tpu_custom_call.1} parent=0 // pred_fallthru
    _
  %v14 = vld [vmem:[%s1] sm:$0xff]
  %v15 = vld [vmem:[%s1 + $0x8] sm:$0xff]
  %v16 = vld [vmem:[%s1 + $0x10] sm:$0xff]
  %v17 = vld [vmem:[%s1 + $0x18] sm:$0xff]
  %v18 = vld [vmem:[%s1 + $0x20] sm:$0xff]
  %v19 = vld [vmem:[%s1 + $0x28] sm:$0xff]
  %v20 = vld [vmem:[%s1 + $0x30] sm:$0xff]
  %v21 = vld [vmem:[%s1 + $0x38] sm:$0xff]
  %v22 = vld [vmem:[%s1 + $0x40] sm:$0xff]
  %v23 = vld [vmem:[%s0] sm:$0xff]
  %v24 = vld [vmem:[%s0 + $0x8] sm:$0xff]
  %v25 = vld [vmem:[%s0 + $0x10] sm:$0xff]
  %v26 = vld [vmem:[%s0 + $0x18] sm:$0xff]
  %v27 = vld [vmem:[%s0 + $0x20] sm:$0xff]
  %v28 = vld [vmem:[%s0 + $0x28] sm:$0xff]
  %v29 = vld [vmem:[%s0 + $0x30] sm:$0xff]
  %v30 = vld [vmem:[%s0 + $0x38] sm:$0xff]
  %v31 = vld [vmem:[%s0 + $0x40] sm:$0xff]
  %32 = vxpose.xlu0.b32.start [1/16] %v14, 128
  %33 = vxpose.xlu0.b32.cont [2/16] %v15, 128
  %34 = vxpose.xlu0.b32.cont [3/16] %v16, 128
  %35 = vxpose.xlu0.b32.cont [4/16] %v17, 128
  %36 = vxpose.xlu0.b32.cont [5/16] %v18, 128
  %37 = vxpose.xlu0.b32.cont [6/16] %v19, 128
  %38 = vxpose.xlu0.b32.cont [7/16] %v20, 128
  %39 = vxpose.xlu0.b32.cont [8/16] %v21, 128
  %40 = vxpose.xlu0.b32.cont [9/16] %v22, 128
  %41 = vxpose.xlu0.b32.cont [10/16] 0.0, 128
  %42 = vxpose.xlu0.b32.cont [11/16] 0.0, 128
  %43 = vxpose.xlu0.b32.cont [12/16] 0.0, 128
  %44 = vxpose.xlu0.b32.cont [13/16] 0.0, 128
  %45 = vxpose.xlu0.b32.cont [14/16] 0.0, 128
  %46 = vxpose.xlu0.b32.cont [15/16] 0.0, 128
  %47 = vxpose.xlu0.b32.end [16/16] 0.0, 128
  %v48 = vpop.trf.xlu0
  %v49 = vpop.trf.xlu0
  %v50 = vpop.trf.xlu0
  %v51 = vpop.trf.xlu0
  %v52 = vpop.trf.xlu0
  %v53 = vpop.trf.xlu0
  %v54 = vpop.trf.xlu0
  %v55 = vpop.trf.xlu0
  %v56 = vpop.trf.xlu0
  %v57 = vpop.trf.xlu0
  %v58 = vpop.trf.xlu0
  %v59 = vpop.trf.xlu0
  %v60 = vpop.trf.xlu0
  %v61 = vpop.trf.xlu0
  %v62 = vpop.trf.xlu0
  %v63 = vpop.trf.xlu0
  %vm64 = vcmask 588800
  %v66 = vsel %vm64, %v48, 0
  %v69 = vsel %vm64, %v49, 0
  %v72 = vsel %vm64, %v50, 0
  %v75 = vsel %vm64, %v51, 0
  %77 = vmatprep.subr.mxu0 0.0
  %78 = vmatpush1.msra.mxu0 %v23
  %79 = vmatprep.subr.mxu0 0.0
  %80 = vmatpush1.msra.mxu0 %v24
  %81 = vmatprep.subr.mxu0 0.0
  %82 = vmatpush1.msra.mxu0 %v25
  %83 = vmatprep.subr.mxu0 0.0
  %84 = vmatpush1.msra.mxu0 %v26
  %85 = vmatprep.subr.mxu0 0.0
  %86 = vmatpush1.msra.mxu0 %v27
  %87 = vmatprep.subr.mxu0 0.0
  %88 = vmatpush1.msra.mxu0 %v28
  %89 = vmatprep.subr.mxu0 0.0
  %90 = vmatpush1.msra.mxu0 %v29
  %91 = vmatprep.subr.mxu0 0.0
  %92 = vmatpush1.msra.mxu0 %v30
  %93 = vmatprep.subr.mxu0 0.0
  %94 = vmatpush1.msra.mxu0 %v31
  %95 = vmatprep.subr.mxu0 0.0
  %96 = vmatpush1.msra.mxu0 0.0
  %97 = vmatprep.subr.mxu0 0.0
  %98 = vmatpush1.msra.mxu0 0.0
  %99 = vmatprep.subr.mxu0 0.0
  %100 = vmatpush1.msra.mxu0 0.0
  %101 = vmatprep.subr.mxu0 0.0
  %102 = vmatpush1.msra.mxu0 0.0
  %103 = vmatprep.subr.mxu0 0.0
  %104 = vmatpush1.msra.mxu0 0.0
  %105 = vmatprep.subr.mxu0 0.0
  %106 = vmatpush1.msra.mxu0 0.0
  %107 = vmatprep.subr.mxu0 0.0
  %108 = vmatpush1.msra.mxu0 0.0
  %109 = vmatprep.subr.mxu0 0.0
  %110 = vmatpush1.msra.mxu0 0.0
  %111 = vmatprep.subr.mxu0 0.0
  %112 = vmatpush1.msra.mxu0 0.0
  %113 = vmatprep.subr.mxu0 0.0
  %114 = vmatpush1.msra.mxu0 0.0
  %115 = vmatprep.subr.mxu0 0.0
  %116 = vmatpush1.msra.mxu0 0.0
  %117 = vmatprep.subr.mxu0 0.0
  %118 = vmatpush1.msra.mxu0 0.0
  %119 = vmatprep.subr.mxu0 0.0
  %120 = vmatpush1.msra.mxu0 0.0
  %121 = vmatprep.subr.mxu0 0.0
  %122 = vmatpush1.msra.mxu0 0.0
  %123 = vmatprep.subr.mxu0 0.0
  %124 = vmatpush1.msra.mxu0 0.0
  %125 = vmatprep.subr.mxu0 0.0
  %126 = vmatpush1.msra.mxu0 0.0
  %127 = vmatprep.subr.mxu0 0.0
  %128 = vmatpush1.msra.mxu0 0.0
  %129 = vmatprep.subr.mxu0 0.0
  %130 = vmatpush1.msra.mxu0 0.0
  %131 = vmatprep.subr.mxu0 0.0
  %132 = vmatpush1.msra.mxu0 0.0
  %133 = vmatprep.subr.mxu0 0.0
  %134 = vmatpush1.msra.mxu0 0.0
  %135 = vmatprep.subr.mxu0 0.0
  %136 = vmatpush1.msra.mxu0 0.0
  %137 = vmatprep.subr.mxu0 0.0
  %138 = vmatpush1.msra.mxu0 0.0
  %139 = vmatprep.subr.mxu0 0.0
  %140 = vmatpush1.msra.mxu0 0.0
  %141 = vmatprep.mubr.f32.mxu0 0.0
  %142 = vmatmul.mubr.f32.gmra.mrb[0].mxu0 %v66
  %v143 = vpop.f32.mrb[0].mxu0
  %v144 = vadd.f32 0.0, %v143
  %v145 = vpop.f32.mrb[0].mxu0
  %146 = vmatprep.mubr.f32.mxu0 0.0
  %147 = vmatmul.mubr.f32.gmra.mrb[0].mxu0 %v69
  %v148 = vpop.f32.mrb[0].mxu0
  %v149 = vadd.f32 0.0, %v148
  %v150 = vpop.f32.mrb[0].mxu0
  %151 = vmatprep.mubr.f32.mxu0 0.0
  %152 = vmatmul.mubr.f32.gmra.mrb[0].mxu0 %v72
  %v153 = vpop.f32.mrb[0].mxu0
  %v154 = vadd.f32 0.0, %v153
  %v155 = vpop.f32.mrb[0].mxu0
  %156 = vmatprep.mubr.f32.mxu0 0.0
  %157 = vmatmul.mubr.f32.gmra.mrb[0].mxu0 %v75
  %v158 = vpop.f32.mrb[0].mxu0
  %v159 = vadd.f32 0.0, %v158
  %v160 = vpop.f32.mrb[0].mxu0
  %161 = vdwg.mxu0
  %vm162 = vcmask 64512
  %v163 = vsel %vm162, %v144, 0.0
  %164 = vadd.xlane.f32.xlu0 %v163
  %v165 = vpop.xlane.xlu0 %164
  %v166 = vsel %vm162, %v149, 0.0
  %167 = vadd.xlane.f32.xlu0 %v166
  %v168 = vpop.xlane.xlu0 %167
  %v169 = vsel %vm162, %v154, 0.0
  %170 = vadd.xlane.f32.xlu0 %v169
  %v171 = vpop.xlane.xlu0 %170
  %v172 = vsel %vm162, %v159, 0.0
  %173 = vadd.xlane.f32.xlu0 %v172
  %v174 = vpop.xlane.xlu0 %173
  %v175 = vrcp.pop 8.0
  %v176 = vmul.f32 %v165, %v175
  %v177 = vmul.f32 %v168, %v175
  %v178 = vmul.f32 %v171, %v175
  %v179 = vmul.f32 %v174, %v175
  %v180 = vsub.f32 %v144, %v176
  %v181 = vsub.f32 %v149, %v177
  %v182 = vsub.f32 %v154, %v178
  %v183 = vsub.f32 %v159, %v179
  %v184 = vmul.f32 %v180, %v180
  %v185 = vmul.f32 %v181, %v181
  %v186 = vmul.f32 %v182, %v182
  %v187 = vmul.f32 %v183, %v183
  %v188 = vsel %vm162, %v184, 0.0
  %189 = vadd.xlane.f32.xlu0 %v188
  %v190 = vpop.xlane.xlu0 %189
  %v191 = vsel %vm162, %v185, 0.0
  %192 = vadd.xlane.f32.xlu0 %v191
  %v193 = vpop.xlane.xlu0 %192
  %v194 = vsel %vm162, %v186, 0.0
  %195 = vadd.xlane.f32.xlu0 %v194
  %v196 = vpop.xlane.xlu0 %195
  %v197 = vsel %vm162, %v187, 0.0
  %198 = vadd.xlane.f32.xlu0 %v197
  %v199 = vpop.xlane.xlu0 %198
  %v200 = vmul.f32 %v190, %v175
  %v201 = vmul.f32 %v193, %v175
  %v202 = vmul.f32 %v196, %v175
  %v203 = vmul.f32 %v199, %v175
  %v204 = vadd.f32 %v200, 1e-05
  %v205 = vadd.f32 %v201, 1e-05
  %v206 = vadd.f32 %v202, 1e-05
  %v207 = vadd.f32 %v203, 1e-05
  %v208 = vrsqrt.pop %v204
  %v209 = vrsqrt.pop %v205
  %v210 = vrsqrt.pop %v206
  %v211 = vrsqrt.pop %v207
  %v212 = vmax.f32 %v180, 0.0
  %v213 = vmax.f32 %v181, 0.0
  %v214 = vmax.f32 %v182, 0.0
  %v215 = vmax.f32 %v183, 0.0
  %v216 = vld [vmem:[%s1 + $0x48] sm:$0xff]
  %v217 = vld [vmem:[%s1 + $0x50] sm:$0xff]
  %v218 = vld [vmem:[%s1 + $0x58] sm:$0xff]
  %v219 = vld [vmem:[%s1 + $0x60] sm:$0xff]
  %v220 = vmul.f32 %v216, %v208
  %v221 = vmul.f32 %v217, %v209
  %v222 = vmul.f32 %v218, %v210
  %v223 = vmul.f32 %v219, %v211
  %224 = vxpose.xlu0.b32.start [1/16] %v220, 128
  %225 = vxpose.xlu0.b32.cont [2/16] %v221, 128
  %226 = vxpose.xlu0.b32.cont [3/16] %v222, 128
  %227 = vxpose.xlu0.b32.cont [4/16] %v223, 128
  %228 = vxpose.xlu0.b32.cont [5/16] 0.0, 128
  %229 = vxpose.xlu0.b32.cont [6/16] 0.0, 128
  %230 = vxpose.xlu0.b32.cont [7/16] 0.0, 128
  %231 = vxpose.xlu0.b32.cont [8/16] 0.0, 128
  %232 = vxpose.xlu0.b32.cont [9/16] 0.0, 128
  %233 = vxpose.xlu0.b32.cont [10/16] 0.0, 128
  %234 = vxpose.xlu0.b32.cont [11/16] 0.0, 128
  %235 = vxpose.xlu0.b32.cont [12/16] 0.0, 128
  %236 = vxpose.xlu0.b32.cont [13/16] 0.0, 128
  %237 = vxpose.xlu0.b32.cont [14/16] 0.0, 128
  %238 = vxpose.xlu0.b32.cont [15/16] 0.0, 128
  %239 = vxpose.xlu0.b32.end [16/16] 0.0, 128
  %v240 = vpop.trf.xlu0
  %v241 = vpop.trf.xlu0
  %v242 = vpop.trf.xlu0
  %v243 = vpop.trf.xlu0
  %v244 = vpop.trf.xlu0
  %v245 = vpop.trf.xlu0
  %v246 = vpop.trf.xlu0
  %v247 = vpop.trf.xlu0
  %v248 = vpop.trf.xlu0
  %v249 = vpop.trf.xlu0
  %v250 = vpop.trf.xlu0
  %v251 = vpop.trf.xlu0
  %v252 = vpop.trf.xlu0
  %v253 = vpop.trf.xlu0
  %v254 = vpop.trf.xlu0
  %v255 = vpop.trf.xlu0
  %vm256 = vcmask 261120
  %v258 = vsel %vm256, %v240, 0
  %v261 = vsel %vm256, %v241, 0
  %v264 = vsel %vm256, %v242, 0
  %v267 = vsel %vm256, %v243, 0
  %269 = vmatprep.subr.mxu0 0.0
  %270 = vmatpush1.msra.mxu0 %v212
  %271 = vmatprep.subr.mxu0 0.0
  %272 = vmatpush1.msra.mxu0 %v213
  %273 = vmatprep.subr.mxu0 0.0
  %274 = vmatpush1.msra.mxu0 %v214
  %275 = vmatprep.subr.mxu0 0.0
  %276 = vmatpush1.msra.mxu0 %v215
  %277 = vmatprep.subr.mxu0 0.0
  %278 = vmatpush1.msra.mxu0 0.0
  %279 = vmatprep.subr.mxu0 0.0
  %280 = vmatpush1.msra.mxu0 0.0
  %281 = vmatprep.subr.mxu0 0.0
  %282 = vmatpush1.msra.mxu0 0.0
  %283 = vmatprep.subr.mxu0 0.0
  %284 = vmatpush1.msra.mxu0 0.0
  %285 = vmatprep.subr.mxu0 0.0
  %286 = vmatpush1.msra.mxu0 0.0
  %287 = vmatprep.subr.mxu0 0.0
  %288 = vmatpush1.msra.mxu0 0.0
  %289 = vmatprep.subr.mxu0 0.0
  %290 = vmatpush1.msra.mxu0 0.0
  %291 = vmatprep.subr.mxu0 0.0
  %292 = vmatpush1.msra.mxu0 0.0
  %293 = vmatprep.subr.mxu0 0.0
  %294 = vmatpush1.msra.mxu0 0.0
  %295 = vmatprep.subr.mxu0 0.0
  %296 = vmatpush1.msra.mxu0 0.0
  %297 = vmatprep.subr.mxu0 0.0
  %298 = vmatpush1.msra.mxu0 0.0
  %299 = vmatprep.subr.mxu0 0.0
  %300 = vmatpush1.msra.mxu0 0.0
  %301 = vmatprep.subr.mxu0 0.0
  %302 = vmatpush1.msra.mxu0 0.0
  %303 = vmatprep.subr.mxu0 0.0
  %304 = vmatpush1.msra.mxu0 0.0
  %305 = vmatprep.subr.mxu0 0.0
  %306 = vmatpush1.msra.mxu0 0.0
  %307 = vmatprep.subr.mxu0 0.0
  %308 = vmatpush1.msra.mxu0 0.0
  %309 = vmatprep.subr.mxu0 0.0
  %310 = vmatpush1.msra.mxu0 0.0
  %311 = vmatprep.subr.mxu0 0.0
  %312 = vmatpush1.msra.mxu0 0.0
  %313 = vmatprep.subr.mxu0 0.0
  %314 = vmatpush1.msra.mxu0 0.0
  %315 = vmatprep.subr.mxu0 0.0
  %316 = vmatpush1.msra.mxu0 0.0
  %317 = vmatprep.subr.mxu0 0.0
  %318 = vmatpush1.msra.mxu0 0.0
  %319 = vmatprep.subr.mxu0 0.0
  %320 = vmatpush1.msra.mxu0 0.0
  %321 = vmatprep.subr.mxu0 0.0
  %322 = vmatpush1.msra.mxu0 0.0
  %323 = vmatprep.subr.mxu0 0.0
  %324 = vmatpush1.msra.mxu0 0.0
  %325 = vmatprep.subr.mxu0 0.0
  %326 = vmatpush1.msra.mxu0 0.0
  %327 = vmatprep.subr.mxu0 0.0
  %328 = vmatpush1.msra.mxu0 0.0
  %329 = vmatprep.subr.mxu0 0.0
  %330 = vmatpush1.msra.mxu0 0.0
  %331 = vmatprep.subr.mxu0 0.0
  %332 = vmatpush1.msra.mxu0 0.0
  %333 = vmatprep.mubr.f32.mxu0 0.0
  %334 = vmatmul.mubr.f32.gmra.mrb[0].mxu0 %v258
  %v335 = vpop.f32.mrb[0].mxu0
  %v336 = vadd.f32 0.0, %v335
  %v337 = vpop.f32.mrb[0].mxu0
  %338 = vmatprep.mubr.f32.mxu0 0.0
  %339 = vmatmul.mubr.f32.gmra.mrb[0].mxu0 %v261
  %v340 = vpop.f32.mrb[0].mxu0
  %v341 = vadd.f32 0.0, %v340
  %v342 = vpop.f32.mrb[0].mxu0
  %343 = vmatprep.mubr.f32.mxu0 0.0
  %344 = vmatmul.mubr.f32.gmra.mrb[0].mxu0 %v264
  %v345 = vpop.f32.mrb[0].mxu0
  %v346 = vadd.f32 0.0, %v345
  %v347 = vpop.f32.mrb[0].mxu0
  %348 = vmatprep.mubr.f32.mxu0 0.0
  %349 = vmatmul.mubr.f32.gmra.mrb[0].mxu0 %v267
  %v350 = vpop.f32.mrb[0].mxu0
  %v351 = vadd.f32 0.0, %v350
  %v352 = vpop.f32.mrb[0].mxu0
  %353 = vdwg.mxu0
  %v354 = vsel %vm162, %v336, 0.0
  %355 = vadd.xlane.f32.xlu0 %v354
  %v356 = vpop.xlane.xlu0 %355
  %v357 = vsel %vm162, %v341, 0.0
  %358 = vadd.xlane.f32.xlu0 %v357
  %v359 = vpop.xlane.xlu0 %358
  %v360 = vsel %vm162, %v346, 0.0
  %361 = vadd.xlane.f32.xlu0 %v360
  %v362 = vpop.xlane.xlu0 %361
  %v363 = vsel %vm162, %v351, 0.0
  %364 = vadd.xlane.f32.xlu0 %v363
  %v365 = vpop.xlane.xlu0 %364
  %v366 = vmul.f32 %v356, %v175
  %v367 = vmul.f32 %v359, %v175
  %v368 = vmul.f32 %v362, %v175
  %v369 = vmul.f32 %v365, %v175
  %v370 = vsub.f32 %v336, %v366
  %v371 = vsub.f32 %v341, %v367
  %v372 = vsub.f32 %v346, %v368
  %v373 = vsub.f32 %v351, %v369
  %v374 = vmul.f32 %v370, %v370
  %v375 = vmul.f32 %v371, %v371
  %v376 = vmul.f32 %v372, %v372
  %v377 = vmul.f32 %v373, %v373
  %v378 = vsel %vm162, %v374, 0.0
  %379 = vadd.xlane.f32.xlu0 %v378
  %v380 = vpop.xlane.xlu0 %379
  %v381 = vsel %vm162, %v375, 0.0
  %382 = vadd.xlane.f32.xlu0 %v381
  %v383 = vpop.xlane.xlu0 %382
  %v384 = vsel %vm162, %v376, 0.0
  %385 = vadd.xlane.f32.xlu0 %v384
  %v386 = vpop.xlane.xlu0 %385
  %v387 = vsel %vm162, %v377, 0.0
  %388 = vadd.xlane.f32.xlu0 %v387
  %v389 = vpop.xlane.xlu0 %388
  %v390 = vmul.f32 %v380, %v175
  %v391 = vmul.f32 %v383, %v175
  %v392 = vmul.f32 %v386, %v175
  %v393 = vmul.f32 %v389, %v175
  %v394 = vadd.f32 %v390, 1e-05
  %v395 = vadd.f32 %v391, 1e-05
  %v396 = vadd.f32 %v392, 1e-05
  %v397 = vadd.f32 %v393, 1e-05
  %v398 = vrsqrt.pop %v394
  %v399 = vrsqrt.pop %v395
  %v400 = vrsqrt.pop %v396
  %v401 = vrsqrt.pop %v397
  %v402 = vmax.f32 %v370, 0.0
  %v403 = vmax.f32 %v371, 0.0
  %v404 = vmax.f32 %v372, 0.0
  %v405 = vmax.f32 %v373, 0.0
  %v406 = vld [vmem:[%s1 + $0x68] sm:$0xff]
  %v407 = vld [vmem:[%s1 + $0x70] sm:$0xff]
  %v408 = vld [vmem:[%s1 + $0x78] sm:$0xff]
  %v409 = vld [vmem:[%s1 + $0x80] sm:$0xff]
  %v410 = vmul.f32 %v406, %v398
  %v411 = vmul.f32 %v407, %v399
  %v412 = vmul.f32 %v408, %v400
  %v413 = vmul.f32 %v409, %v401
  %414 = vxpose.xlu0.b32.start [1/16] %v410, 128
  %415 = vxpose.xlu0.b32.cont [2/16] %v411, 128
  %416 = vxpose.xlu0.b32.cont [3/16] %v412, 128
  %417 = vxpose.xlu0.b32.cont [4/16] %v413, 128
  %418 = vxpose.xlu0.b32.cont [5/16] 0.0, 128
  %419 = vxpose.xlu0.b32.cont [6/16] 0.0, 128
  %420 = vxpose.xlu0.b32.cont [7/16] 0.0, 128
  %421 = vxpose.xlu0.b32.cont [8/16] 0.0, 128
  %422 = vxpose.xlu0.b32.cont [9/16] 0.0, 128
  %423 = vxpose.xlu0.b32.cont [10/16] 0.0, 128
  %424 = vxpose.xlu0.b32.cont [11/16] 0.0, 128
  %425 = vxpose.xlu0.b32.cont [12/16] 0.0, 128
  %426 = vxpose.xlu0.b32.cont [13/16] 0.0, 128
  %427 = vxpose.xlu0.b32.cont [14/16] 0.0, 128
  %428 = vxpose.xlu0.b32.cont [15/16] 0.0, 128
  %429 = vxpose.xlu0.b32.end [16/16] 0.0, 128
  %v430 = vpop.trf.xlu0
  %v431 = vpop.trf.xlu0
  %v432 = vpop.trf.xlu0
  %v433 = vpop.trf.xlu0
  %v434 = vpop.trf.xlu0
  %v435 = vpop.trf.xlu0
  %v436 = vpop.trf.xlu0
  %v437 = vpop.trf.xlu0
  %v438 = vpop.trf.xlu0
  %v439 = vpop.trf.xlu0
  %v440 = vpop.trf.xlu0
  %v441 = vpop.trf.xlu0
  %v442 = vpop.trf.xlu0
  %v443 = vpop.trf.xlu0
  %v444 = vpop.trf.xlu0
  %v445 = vpop.trf.xlu0
  %v447 = vsel %vm256, %v430, 0
  %v450 = vsel %vm256, %v431, 0
  %v453 = vsel %vm256, %v432, 0
  %v456 = vsel %vm256, %v433, 0
  %458 = vmatprep.subr.mxu0 0.0
  %459 = vmatpush1.msra.mxu0 %v402
  %460 = vmatprep.subr.mxu0 0.0
  %461 = vmatpush1.msra.mxu0 %v403
  %462 = vmatprep.subr.mxu0 0.0
  %463 = vmatpush1.msra.mxu0 %v404
  %464 = vmatprep.subr.mxu0 0.0
  %465 = vmatpush1.msra.mxu0 %v405
  %466 = vmatprep.subr.mxu0 0.0
  %467 = vmatpush1.msra.mxu0 0.0
  %468 = vmatprep.subr.mxu0 0.0
  %469 = vmatpush1.msra.mxu0 0.0
  %470 = vmatprep.subr.mxu0 0.0
  %471 = vmatpush1.msra.mxu0 0.0
  %472 = vmatprep.subr.mxu0 0.0
  %473 = vmatpush1.msra.mxu0 0.0
  %474 = vmatprep.subr.mxu0 0.0
  %475 = vmatpush1.msra.mxu0 0.0
  %476 = vmatprep.subr.mxu0 0.0
  %477 = vmatpush1.msra.mxu0 0.0
  %478 = vmatprep.subr.mxu0 0.0
  %479 = vmatpush1.msra.mxu0 0.0
  %480 = vmatprep.subr.mxu0 0.0
  %481 = vmatpush1.msra.mxu0 0.0
  %482 = vmatprep.subr.mxu0 0.0
  %483 = vmatpush1.msra.mxu0 0.0
  %484 = vmatprep.subr.mxu0 0.0
  %485 = vmatpush1.msra.mxu0 0.0
  %486 = vmatprep.subr.mxu0 0.0
  %487 = vmatpush1.msra.mxu0 0.0
  %488 = vmatprep.subr.mxu0 0.0
  %489 = vmatpush1.msra.mxu0 0.0
  %490 = vmatprep.subr.mxu0 0.0
  %491 = vmatpush1.msra.mxu0 0.0
  %492 = vmatprep.subr.mxu0 0.0
  %493 = vmatpush1.msra.mxu0 0.0
  %494 = vmatprep.subr.mxu0 0.0
  %495 = vmatpush1.msra.mxu0 0.0
  %496 = vmatprep.subr.mxu0 0.0
  %497 = vmatpush1.msra.mxu0 0.0
  %498 = vmatprep.subr.mxu0 0.0
  %499 = vmatpush1.msra.mxu0 0.0
  %500 = vmatprep.subr.mxu0 0.0
  %501 = vmatpush1.msra.mxu0 0.0
  %502 = vmatprep.subr.mxu0 0.0
  %503 = vmatpush1.msra.mxu0 0.0
  %504 = vmatprep.subr.mxu0 0.0
  %505 = vmatpush1.msra.mxu0 0.0
  %506 = vmatprep.subr.mxu0 0.0
  %507 = vmatpush1.msra.mxu0 0.0
  %508 = vmatprep.subr.mxu0 0.0
  %509 = vmatpush1.msra.mxu0 0.0
  %510 = vmatprep.subr.mxu0 0.0
  %511 = vmatpush1.msra.mxu0 0.0
  %512 = vmatprep.subr.mxu0 0.0
  %513 = vmatpush1.msra.mxu0 0.0
  %514 = vmatprep.subr.mxu0 0.0
  %515 = vmatpush1.msra.mxu0 0.0
  %516 = vmatprep.subr.mxu0 0.0
  %517 = vmatpush1.msra.mxu0 0.0
  %518 = vmatprep.subr.mxu0 0.0
  %519 = vmatpush1.msra.mxu0 0.0
  %520 = vmatprep.subr.mxu0 0.0
  %521 = vmatpush1.msra.mxu0 0.0
  %522 = vmatprep.mubr.f32.mxu0 0.0
  %523 = vmatmul.mubr.f32.gmra.mrb[0].mxu0 %v447
  %v524 = vpop.f32.mrb[0].mxu0
  %v525 = vadd.f32 0.0, %v524
  %v526 = vpop.f32.mrb[0].mxu0
  %527 = vmatprep.mubr.f32.mxu0 0.0
  %528 = vmatmul.mubr.f32.gmra.mrb[0].mxu0 %v450
  %v529 = vpop.f32.mrb[0].mxu0
  %v530 = vadd.f32 0.0, %v529
  %v531 = vpop.f32.mrb[0].mxu0
  %532 = vmatprep.mubr.f32.mxu0 0.0
  %533 = vmatmul.mubr.f32.gmra.mrb[0].mxu0 %v453
  %v534 = vpop.f32.mrb[0].mxu0
  %v535 = vadd.f32 0.0, %v534
  %v536 = vpop.f32.mrb[0].mxu0
  %537 = vmatprep.mubr.f32.mxu0 0.0
  %538 = vmatmul.mubr.f32.gmra.mrb[0].mxu0 %v456
  %v539 = vpop.f32.mrb[0].mxu0
  %v540 = vadd.f32 0.0, %v539
  %v541 = vpop.f32.mrb[0].mxu0
  %542 = vdwg.mxu0
  %v543 = vsel %vm162, %v525, 0.0
  %544 = vadd.xlane.f32.xlu0 %v543
  %v545 = vpop.xlane.xlu0 %544
  %v546 = vsel %vm162, %v530, 0.0
  %547 = vadd.xlane.f32.xlu0 %v546
  %v548 = vpop.xlane.xlu0 %547
  %v549 = vsel %vm162, %v535, 0.0
  %550 = vadd.xlane.f32.xlu0 %v549
  %v551 = vpop.xlane.xlu0 %550
  %v552 = vsel %vm162, %v540, 0.0
  %553 = vadd.xlane.f32.xlu0 %v552
  %v554 = vpop.xlane.xlu0 %553
  %v555 = vmul.f32 %v545, %v175
  %v556 = vmul.f32 %v548, %v175
  %v557 = vmul.f32 %v551, %v175
  %v558 = vmul.f32 %v554, %v175
  %v559 = vsub.f32 %v525, %v555
  %v560 = vsub.f32 %v530, %v556
  %v561 = vsub.f32 %v535, %v557
  %v562 = vsub.f32 %v540, %v558
  %v563 = vmul.f32 %v559, %v559
  %v564 = vmul.f32 %v560, %v560
  %v565 = vmul.f32 %v561, %v561
  %v566 = vmul.f32 %v562, %v562
  %v567 = vsel %vm162, %v563, 0.0
  %568 = vadd.xlane.f32.xlu0 %v567
  %v569 = vpop.xlane.xlu0 %568
  %v570 = vsel %vm162, %v564, 0.0
  %571 = vadd.xlane.f32.xlu0 %v570
  %v572 = vpop.xlane.xlu0 %571
  %v573 = vsel %vm162, %v565, 0.0
  %574 = vadd.xlane.f32.xlu0 %v573
  %v575 = vpop.xlane.xlu0 %574
  %v576 = vsel %vm162, %v566, 0.0
  %577 = vadd.xlane.f32.xlu0 %v576
  %v578 = vpop.xlane.xlu0 %577
  %v579 = vmul.f32 %v569, %v175
  %v580 = vmul.f32 %v572, %v175
  %v581 = vmul.f32 %v575, %v175
  %v582 = vmul.f32 %v578, %v175
  %v583 = vadd.f32 %v579, 1e-05
  %v584 = vadd.f32 %v580, 1e-05
  %v585 = vadd.f32 %v581, 1e-05
  %v586 = vadd.f32 %v582, 1e-05
  %v587 = vrsqrt.pop %v583
  %v588 = vrsqrt.pop %v584
  %v589 = vrsqrt.pop %v585
  %v590 = vrsqrt.pop %v586
  %v591 = vmax.f32 %v559, 0.0
  %v592 = vmax.f32 %v560, 0.0
  %v593 = vmax.f32 %v561, 0.0
  %v594 = vmax.f32 %v562, 0.0
  %v595 = vld [vmem:[%s1 + $0x88] sm:$0xff]
  %v596 = vld [vmem:[%s1 + $0x90] sm:$0xff]
  %v597 = vld [vmem:[%s1 + $0x98] sm:$0xff]
  %v598 = vld [vmem:[%s1 + $0xa0] sm:$0xff]
  %v599 = vmul.f32 %v595, %v587
  %v600 = vmul.f32 %v596, %v588
  %v601 = vmul.f32 %v597, %v589
  %v602 = vmul.f32 %v598, %v590
  %603 = vxpose.xlu0.b32.start [1/16] %v599, 128
  %604 = vxpose.xlu0.b32.cont [2/16] %v600, 128
  %605 = vxpose.xlu0.b32.cont [3/16] %v601, 128
  %606 = vxpose.xlu0.b32.cont [4/16] %v602, 128
  %607 = vxpose.xlu0.b32.cont [5/16] 0.0, 128
  %608 = vxpose.xlu0.b32.cont [6/16] 0.0, 128
  %609 = vxpose.xlu0.b32.cont [7/16] 0.0, 128
  %610 = vxpose.xlu0.b32.cont [8/16] 0.0, 128
  %611 = vxpose.xlu0.b32.cont [9/16] 0.0, 128
  %612 = vxpose.xlu0.b32.cont [10/16] 0.0, 128
  %613 = vxpose.xlu0.b32.cont [11/16] 0.0, 128
  %614 = vxpose.xlu0.b32.cont [12/16] 0.0, 128
  %615 = vxpose.xlu0.b32.cont [13/16] 0.0, 128
  %616 = vxpose.xlu0.b32.cont [14/16] 0.0, 128
  %617 = vxpose.xlu0.b32.cont [15/16] 0.0, 128
  %618 = vxpose.xlu0.b32.end [16/16] 0.0, 128
  %v619 = vpop.trf.xlu0
  %v620 = vpop.trf.xlu0
  %v621 = vpop.trf.xlu0
  %v622 = vpop.trf.xlu0
  %v623 = vpop.trf.xlu0
  %v624 = vpop.trf.xlu0
  %v625 = vpop.trf.xlu0
  %v626 = vpop.trf.xlu0
  %v627 = vpop.trf.xlu0
  %v628 = vpop.trf.xlu0
  %v629 = vpop.trf.xlu0
  %v630 = vpop.trf.xlu0
  %v631 = vpop.trf.xlu0
  %v632 = vpop.trf.xlu0
  %v633 = vpop.trf.xlu0
  %v634 = vpop.trf.xlu0
  %v636 = vsel %vm256, %v619, 0
  %v639 = vsel %vm256, %v620, 0
  %v642 = vsel %vm256, %v621, 0
  %v645 = vsel %vm256, %v622, 0
  %647 = vmatprep.subr.mxu0 0.0
  %648 = vmatpush1.msra.mxu0 %v591
  %649 = vmatprep.subr.mxu0 0.0
  %650 = vmatpush1.msra.mxu0 %v592
  %651 = vmatprep.subr.mxu0 0.0
  %652 = vmatpush1.msra.mxu0 %v593
  %653 = vmatprep.subr.mxu0 0.0
  %654 = vmatpush1.msra.mxu0 %v594
  %655 = vmatprep.subr.mxu0 0.0
  %656 = vmatpush1.msra.mxu0 0.0
  %657 = vmatprep.subr.mxu0 0.0
  %658 = vmatpush1.msra.mxu0 0.0
  %659 = vmatprep.subr.mxu0 0.0
  %660 = vmatpush1.msra.mxu0 0.0
  %661 = vmatprep.subr.mxu0 0.0
  %662 = vmatpush1.msra.mxu0 0.0
  %663 = vmatprep.subr.mxu0 0.0
  %664 = vmatpush1.msra.mxu0 0.0
  %665 = vmatprep.subr.mxu0 0.0
  %666 = vmatpush1.msra.mxu0 0.0
  %667 = vmatprep.subr.mxu0 0.0
  %668 = vmatpush1.msra.mxu0 0.0
  %669 = vmatprep.subr.mxu0 0.0
  %670 = vmatpush1.msra.mxu0 0.0
  %671 = vmatprep.subr.mxu0 0.0
  %672 = vmatpush1.msra.mxu0 0.0
  %673 = vmatprep.subr.mxu0 0.0
  %674 = vmatpush1.msra.mxu0 0.0
  %675 = vmatprep.subr.mxu0 0.0
  %676 = vmatpush1.msra.mxu0 0.0
  %677 = vmatprep.subr.mxu0 0.0
  %678 = vmatpush1.msra.mxu0 0.0
  %679 = vmatprep.subr.mxu0 0.0
  %680 = vmatpush1.msra.mxu0 0.0
  %681 = vmatprep.subr.mxu0 0.0
  %682 = vmatpush1.msra.mxu0 0.0
  %683 = vmatprep.subr.mxu0 0.0
  %684 = vmatpush1.msra.mxu0 0.0
  %685 = vmatprep.subr.mxu0 0.0
  %686 = vmatpush1.msra.mxu0 0.0
  %687 = vmatprep.subr.mxu0 0.0
  %688 = vmatpush1.msra.mxu0 0.0
  %689 = vmatprep.subr.mxu0 0.0
  %690 = vmatpush1.msra.mxu0 0.0
  %691 = vmatprep.subr.mxu0 0.0
  %692 = vmatpush1.msra.mxu0 0.0
  %693 = vmatprep.subr.mxu0 0.0
  %694 = vmatpush1.msra.mxu0 0.0
  %695 = vmatprep.subr.mxu0 0.0
  %696 = vmatpush1.msra.mxu0 0.0
  %697 = vmatprep.subr.mxu0 0.0
  %698 = vmatpush1.msra.mxu0 0.0
  %699 = vmatprep.subr.mxu0 0.0
  %700 = vmatpush1.msra.mxu0 0.0
  %701 = vmatprep.subr.mxu0 0.0
  %702 = vmatpush1.msra.mxu0 0.0
  %703 = vmatprep.subr.mxu0 0.0
  %704 = vmatpush1.msra.mxu0 0.0
  %705 = vmatprep.subr.mxu0 0.0
  %706 = vmatpush1.msra.mxu0 0.0
  %707 = vmatprep.subr.mxu0 0.0
  %708 = vmatpush1.msra.mxu0 0.0
  %709 = vmatprep.subr.mxu0 0.0
  %710 = vmatpush1.msra.mxu0 0.0
  %711 = vmatprep.mubr.f32.mxu0 0.0
  %712 = vmatmul.mubr.f32.gmra.mrb[0].mxu0 %v636
  %v713 = vpop.f32.mrb[0].mxu0
  %v714 = vadd.f32 0.0, %v713
  %v715 = vpop.f32.mrb[0].mxu0
  %716 = vmatprep.mubr.f32.mxu0 0.0
  %717 = vmatmul.mubr.f32.gmra.mrb[0].mxu0 %v639
  %v718 = vpop.f32.mrb[0].mxu0
  %v719 = vadd.f32 0.0, %v718
  %v720 = vpop.f32.mrb[0].mxu0
  %721 = vmatprep.mubr.f32.mxu0 0.0
  %722 = vmatmul.mubr.f32.gmra.mrb[0].mxu0 %v642
  %v723 = vpop.f32.mrb[0].mxu0
  %v724 = vadd.f32 0.0, %v723
  %v725 = vpop.f32.mrb[0].mxu0
  %726 = vmatprep.mubr.f32.mxu0 0.0
  %727 = vmatmul.mubr.f32.gmra.mrb[0].mxu0 %v645
  %v728 = vpop.f32.mrb[0].mxu0
  %v729 = vadd.f32 0.0, %v728
  %v730 = vpop.f32.mrb[0].mxu0
  %731 = vdwg.mxu0
  %v732 = vsel %vm162, %v714, 0.0
  %733 = vadd.xlane.f32.xlu0 %v732
  %v734 = vpop.xlane.xlu0 %733
  %v735 = vsel %vm162, %v719, 0.0
  %736 = vadd.xlane.f32.xlu0 %v735
  %v737 = vpop.xlane.xlu0 %736
  %v738 = vsel %vm162, %v724, 0.0
  %739 = vadd.xlane.f32.xlu0 %v738
  %v740 = vpop.xlane.xlu0 %739
  %v741 = vsel %vm162, %v729, 0.0
  %742 = vadd.xlane.f32.xlu0 %v741
  %v743 = vpop.xlane.xlu0 %742
  %v744 = vmul.f32 %v734, %v175
  %v745 = vmul.f32 %v737, %v175
  %v746 = vmul.f32 %v740, %v175
  %v747 = vmul.f32 %v743, %v175
  %v748 = vsub.f32 %v714, %v744
  %v749 = vsub.f32 %v719, %v745
  %v750 = vsub.f32 %v724, %v746
  %v751 = vsub.f32 %v729, %v747
  %v752 = vmul.f32 %v748, %v748
  %v753 = vmul.f32 %v749, %v749
  %v754 = vmul.f32 %v750, %v750
  %v755 = vmul.f32 %v751, %v751
  %v756 = vsel %vm162, %v752, 0.0
  %757 = vadd.xlane.f32.xlu0 %v756
  %v758 = vpop.xlane.xlu0 %757
  %v759 = vsel %vm162, %v753, 0.0
  %760 = vadd.xlane.f32.xlu0 %v759
  %v761 = vpop.xlane.xlu0 %760
  %v762 = vsel %vm162, %v754, 0.0
  %763 = vadd.xlane.f32.xlu0 %v762
  %v764 = vpop.xlane.xlu0 %763
  %v765 = vsel %vm162, %v755, 0.0
  %766 = vadd.xlane.f32.xlu0 %v765
  %v767 = vpop.xlane.xlu0 %766
  %v768 = vmul.f32 %v758, %v175
  %v769 = vmul.f32 %v761, %v175
  %v770 = vmul.f32 %v764, %v175
  %v771 = vmul.f32 %v767, %v175
  %v772 = vadd.f32 %v768, 1e-05
  %v773 = vadd.f32 %v769, 1e-05
  %v774 = vadd.f32 %v770, 1e-05
  %v775 = vadd.f32 %v771, 1e-05
  %v776 = vrsqrt.pop %v772
  %v777 = vrsqrt.pop %v773
  %v778 = vrsqrt.pop %v774
  %v779 = vrsqrt.pop %v775
  %v780 = vmax.f32 %v748, 0.0
  %v781 = vmax.f32 %v749, 0.0
  %v782 = vmax.f32 %v750, 0.0
  %v783 = vmax.f32 %v751, 0.0
  %v784 = vld [vmem:[%s1 + $0xa8] sm:$0xff]
  %v785 = vld [vmem:[%s1 + $0xb0] sm:$0xff]
  %v786 = vld [vmem:[%s1 + $0xb8] sm:$0xff]
  %v787 = vld [vmem:[%s1 + $0xc0] sm:$0xff]
  %v788 = vmul.f32 %v784, %v776
  %v789 = vmul.f32 %v785, %v777
  %v790 = vmul.f32 %v786, %v778
  %v791 = vmul.f32 %v787, %v779
  %v792 = vld [vmem:[%s2] sm:$0xff]
  %v793 = vld [vmem:[%s2 + $0x8] sm:$0xff]
  %v794 = vld [vmem:[%s2 + $0x10] sm:$0xff]
  %v795 = vld [vmem:[%s2 + $0x18] sm:$0xff]
  %797 = vset.pattern.permute.xlu0 0
  %798 = vperm.xlu0 %797, %v792
  %v799 = vpop.permute.xlu0 %798
  %802 = vset.pattern.permute.xlu0 0
  %803 = vperm.xlu0 %802, %v793
  %v804 = vpop.permute.xlu0 %803
  %807 = vset.pattern.permute.xlu0 0
  %808 = vperm.xlu0 %807, %v794
  %v809 = vpop.permute.xlu0 %808
  %812 = vset.pattern.permute.xlu0 0
  %813 = vperm.xlu0 %812, %v795
  %v814 = vpop.permute.xlu0 %813
  %816 = vxpose.xlu0.b32.start [1/16] %v788, 128
  %817 = vxpose.xlu0.b32.cont [2/16] %v789, 128
  %818 = vxpose.xlu0.b32.cont [3/16] %v790, 128
  %819 = vxpose.xlu0.b32.cont [4/16] %v791, 128
  %820 = vxpose.xlu0.b32.cont [5/16] 0.0, 128
  %821 = vxpose.xlu0.b32.cont [6/16] 0.0, 128
  %822 = vxpose.xlu0.b32.cont [7/16] 0.0, 128
  %823 = vxpose.xlu0.b32.cont [8/16] 0.0, 128
  %824 = vxpose.xlu0.b32.cont [9/16] 0.0, 128
  %825 = vxpose.xlu0.b32.cont [10/16] 0.0, 128
  %826 = vxpose.xlu0.b32.cont [11/16] 0.0, 128
  %827 = vxpose.xlu0.b32.cont [12/16] 0.0, 128
  %828 = vxpose.xlu0.b32.cont [13/16] 0.0, 128
  %829 = vxpose.xlu0.b32.cont [14/16] 0.0, 128
  %830 = vxpose.xlu0.b32.cont [15/16] 0.0, 128
  %831 = vxpose.xlu0.b32.end [16/16] 0.0, 128
  %v832 = vpop.trf.xlu0
  %v833 = vpop.trf.xlu0
  %v834 = vpop.trf.xlu0
  %v835 = vpop.trf.xlu0
  %v836 = vpop.trf.xlu0
  %v837 = vpop.trf.xlu0
  %v838 = vpop.trf.xlu0
  %v839 = vpop.trf.xlu0
  %v840 = vpop.trf.xlu0
  %v841 = vpop.trf.xlu0
  %v842 = vpop.trf.xlu0
  %v843 = vpop.trf.xlu0
  %v844 = vpop.trf.xlu0
  %v845 = vpop.trf.xlu0
  %v846 = vpop.trf.xlu0
  %v847 = vpop.trf.xlu0
  %v849 = vsel %vm256, %v832, 0
  %v852 = vsel %vm256, %v833, 0
  %v855 = vsel %vm256, %v834, 0
  %v858 = vsel %vm256, %v835, 0
  %860 = vmatprep.subr.mxu0 0.0
  %861 = vmatpush1.msra.mxu0 %v780
  %862 = vmatprep.subr.mxu0 0.0
  %863 = vmatpush1.msra.mxu0 %v781
  %864 = vmatprep.subr.mxu0 0.0
  %865 = vmatpush1.msra.mxu0 %v782
  %866 = vmatprep.subr.mxu0 0.0
  %867 = vmatpush1.msra.mxu0 %v783
  %868 = vmatprep.subr.mxu0 0.0
  %869 = vmatpush1.msra.mxu0 0.0
  %870 = vmatprep.subr.mxu0 0.0
  %871 = vmatpush1.msra.mxu0 0.0
  %872 = vmatprep.subr.mxu0 0.0
  %873 = vmatpush1.msra.mxu0 0.0
  %874 = vmatprep.subr.mxu0 0.0
  %875 = vmatpush1.msra.mxu0 0.0
  %876 = vmatprep.subr.mxu0 0.0
  %877 = vmatpush1.msra.mxu0 0.0
  %878 = vmatprep.subr.mxu0 0.0
  %879 = vmatpush1.msra.mxu0 0.0
  %880 = vmatprep.subr.mxu0 0.0
  %881 = vmatpush1.msra.mxu0 0.0
  %882 = vmatprep.subr.mxu0 0.0
  %883 = vmatpush1.msra.mxu0 0.0
  %884 = vmatprep.subr.mxu0 0.0
  %885 = vmatpush1.msra.mxu0 0.0
  %886 = vmatprep.subr.mxu0 0.0
  %887 = vmatpush1.msra.mxu0 0.0
  %888 = vmatprep.subr.mxu0 0.0
  %889 = vmatpush1.msra.mxu0 0.0
  %890 = vmatprep.subr.mxu0 0.0
  %891 = vmatpush1.msra.mxu0 0.0
  %892 = vmatprep.subr.mxu0 0.0
  %893 = vmatpush1.msra.mxu0 0.0
  %894 = vmatprep.subr.mxu0 0.0
  %895 = vmatpush1.msra.mxu0 0.0
  %896 = vmatprep.subr.mxu0 0.0
  %897 = vmatpush1.msra.mxu0 0.0
  %898 = vmatprep.subr.mxu0 0.0
  %899 = vmatpush1.msra.mxu0 0.0
  %900 = vmatprep.subr.mxu0 0.0
  %901 = vmatpush1.msra.mxu0 0.0
  %902 = vmatprep.subr.mxu0 0.0
  %903 = vmatpush1.msra.mxu0 0.0
  %904 = vmatprep.subr.mxu0 0.0
  %905 = vmatpush1.msra.mxu0 0.0
  %906 = vmatprep.subr.mxu0 0.0
  %907 = vmatpush1.msra.mxu0 0.0
  %908 = vmatprep.subr.mxu0 0.0
  %909 = vmatpush1.msra.mxu0 0.0
  %910 = vmatprep.subr.mxu0 0.0
  %911 = vmatpush1.msra.mxu0 0.0
  %912 = vmatprep.subr.mxu0 0.0
  %913 = vmatpush1.msra.mxu0 0.0
  %914 = vmatprep.subr.mxu0 0.0
  %915 = vmatpush1.msra.mxu0 0.0
  %916 = vmatprep.subr.mxu0 0.0
  %917 = vmatpush1.msra.mxu0 0.0
  %918 = vmatprep.subr.mxu0 0.0
  %919 = vmatpush1.msra.mxu0 0.0
  %920 = vmatprep.subr.mxu0 0.0
  %921 = vmatpush1.msra.mxu0 0.0
  %922 = vmatprep.subr.mxu0 0.0
  %923 = vmatpush1.msra.mxu0 0.0
  %924 = vmatprep.mubr.f32.mxu0 0.0
  %925 = vmatmul.mubr.f32.gmra.mrb[0].mxu0 %v849
  %v926 = vpop.f32.mrb[0].mxu0
  %v927 = vadd.f32 %v799, %v926
  %v928 = vpop.f32.mrb[0].mxu0
  %929 = vmatprep.mubr.f32.mxu0 0.0
  %930 = vmatmul.mubr.f32.gmra.mrb[0].mxu0 %v852
  %v931 = vpop.f32.mrb[0].mxu0
  %v932 = vadd.f32 %v804, %v931
  %v933 = vpop.f32.mrb[0].mxu0
  %934 = vmatprep.mubr.f32.mxu0 0.0
  %935 = vmatmul.mubr.f32.gmra.mrb[0].mxu0 %v855
  %v936 = vpop.f32.mrb[0].mxu0
  %v937 = vadd.f32 %v809, %v936
  %v938 = vpop.f32.mrb[0].mxu0
  %939 = vmatprep.mubr.f32.mxu0 0.0
  %940 = vmatmul.mubr.f32.gmra.mrb[0].mxu0 %v858
  %v941 = vpop.f32.mrb[0].mxu0
  %v942 = vadd.f32 %v814, %v941
  %v943 = vpop.f32.mrb[0].mxu0
  %944 = vdwg.mxu0
  %945 = vst.msk [vmem:[%s3] sm:$0xff] %vm162, %v927
  %946 = vst.msk [vmem:[%s3 + $0x8] sm:$0xff] %vm162, %v932
  %947 = vst.msk [vmem:[%s3 + $0x10] sm:$0xff] %vm162, %v937
  %948 = vst.msk [vmem:[%s3 + $0x18] sm:$0xff] %vm162, %v942
  // Predicated region
  $region14: #{tpu_custom_call.1} parent=0 // pred_check
    _
  $region15: #{tpu_custom_call.1} parent=0 // pred_check_branch
    %950 = sbr.rel (0) target = $region17
  $region16: #{tpu_custom_call.1} parent=0 // pred_region
    _
  $region17: #{tpu_custom_call.1} parent=0 // pred_fallthru
    _
  // Predicated region
  $region18: #{tpu_custom_call.1} parent=0 // pred_check
    _
  $region19: #{tpu_custom_call.1} parent=0 // pred_check_branch
    %952 = sbr.rel (0) target = $region21
  $region20: #{tpu_custom_call.1} parent=0 // pred_region
    _
  $region21: #{tpu_custom_call.1} parent=0 // pred_fallthru
    _

</llo_original>
